<compile_context>
chip_gen: v7x
topology: tpu7x:2x2x1
jax: 0.10.0
libtpu: 0.0.40
codegen_flags: <defaults>
</compile_context>

<pallas_src>
import math

import jax
import jax.numpy as jnp
from jax import lax
from jax.experimental import pallas as pl
from jax.experimental.pallas import tpu as pltpu


# --------------------------------------------------------------------------- #
# Kernel                                                                      #
# --------------------------------------------------------------------------- #
def _swiglu_kernel(x_ref, w1_ref, w3_ref, w2_ref, o_ref, acc_ref):
    """One (row-tile, d_ff-chunk) grid step of the fused SwiGLU."""
    j = pl.program_id(1)

    @pl.when(j == 0)
    def _init():
        acc_ref[...] = jnp.zeros_like(acc_ref)

    # Contract on the last dim of BOTH operands -> weights keep their native
    # layout, no wrapper transpose needed.
    dnums = (((1,), (1,)), ((), ()))

    x = x_ref[...]                                                   # (tm, d_model) bf16
    h1 = lax.dot_general(x, w1_ref[...], dnums,
                         preferred_element_type=jnp.float32)        # (tm, tf)
    h3 = lax.dot_general(x, w3_ref[...], dnums,
                         preferred_element_type=jnp.float32)        # (tm, tf)

    # SiLU gate in f32: sigmoid goes to the EUP slot, multiplies to the VPU.
    g = (h1 * jax.nn.sigmoid(h1)) * h3                               # (tm, tf) f32

    # Down projection for this d_ff chunk, accumulated across chunks in f32.
    # (g is quantized to the weight/compute dtype — bf16 — before the MXU.)
    acc_ref[...] += lax.dot_general(g.astype(w2_ref.dtype), w2_ref[...], dnums,
                                    preferred_element_type=jnp.float32)

    @pl.when(j == pl.num_programs(1) - 1)
    def _finalize():
        o_ref[...] = acc_ref[...].astype(o_ref.dtype)


# --------------------------------------------------------------------------- #
# Tiling heuristics (VMEM- and roofline-aware)                                #
# --------------------------------------------------------------------------- #
def _round_up(x: int, m: int) -> int:
    return ((x + m - 1) // m) * m


def _vmem_capacity_bytes() -> int:
    """Physical VMEM per core; conservative (v7x-sized) fallback."""
    try:
        info = pltpu.get_tpu_info()
        cap = getattr(info, "vmem_capacity_bytes", None)
        if cap:
            return int(cap)
    except Exception:
        pass
    return 64 * 1024 * 1024


def _ff_tile_candidates(d_ff: int) -> list[int]:
    """Lane-aligned (multiple-of-128) exact divisors of d_ff, descending."""
    cands = [t for t in range(128, d_ff + 1, 128) if d_ff % t == 0]
    if not cands:
        # No lane-aligned divisor (e.g. tiny d_ff): a single full chunk.  The
        # reduction axis must divide exactly, so we never use ragged chunks.
        return [d_ff]
    return sorted(cands, reverse=True)


def _select_tiles(rows: int, d_model: int, d_ff: int,
                  compute_itemsize: int, out_itemsize: int,
                  vmem_cap: int) -> tuple[int, int, int]:
    """Pick (tm, tf) and return (tm, tf, vmem_bytes_needed)."""
    budget = int(vmem_cap * 0.75)          # ~25% headroom for compiler scratch

    # Row-tile target by generation roofline: weight reuse per pass ~ tm rows.
    big_vmem = vmem_cap >= (96 << 20)      # v5e / v6e (128 MiB) vs v7x (64 MiB)
    tm_target = 512 if big_vmem else 384

    if rows <= 8:
        tm = rows
    else:
        tm = min(tm_target, _round_up(rows, 8))
        # Guarantee >=2 row tiles so dual-TensorCore chips (v7x) can shard the
        # "parallel" axis; costs one extra (cheap) grid step elsewhere.
        if rows > 16 and pl.cdiv(rows, tm) < 2:
            tm = _round_up(pl.cdiv(rows, 2), 8)

    ff_cands = _ff_tile_candidates(d_ff)

    def vmem_need(tm_: int, tf_: int) -> int:
        return (2 * tm_ * d_model * compute_itemsize          # x   (double-buffered)
                + 2 * 3 * tf_ * d_model * compute_itemsize    # W1, W3, W2 chunks (dbuf)
                + 2 * tm_ * d_model * out_itemsize            # out (double-buffered)
                + 4 * tm_ * d_model)                          # f32 accumulator

    while True:
        for tf in ff_cands:                       # largest d_ff chunk that fits
            need = vmem_need(tm, tf)
            if need <= budget:
                return tm, tf, need
        if tm <= 8:                               # give up shrinking; take smallest
            tf = ff_cands[-1]
            return tm, tf, vmem_need(tm, tf)
        tm = max(8, _round_up(tm // 2, 8))        # shrink row tile and retry


# --------------------------------------------------------------------------- #
# Wrapper                                                                     #
# --------------------------------------------------------------------------- #
def swiglu(x: jax.Array, w1: jax.Array, w2: jax.Array, w3: jax.Array) -> jax.Array:
    """SwiGLU over the last dim of x.  w1, w3: [d_ff, d_model]; w2: [d_model, d_ff]."""
    orig_shape = x.shape
    out_dtype = x.dtype
    d_model = orig_shape[-1]
    d_ff = w1.shape[0]
    assert w1.shape == (d_ff, d_model)
    assert w3.shape == (d_ff, d_model)
    assert w2.shape == (d_model, d_ff)

    x2d = x.reshape(-1, d_model)
    rows = x2d.shape[0]

    # MXU compute dtype: bf16 operands, f32 accumulation.  In a real model the
    # weights would already be stored bf16; here the (no-op if already bf16)
    # cast replaces the old per-call transposes and halves weight streaming.
    compute_dtype = jnp.bfloat16
    x_c = x2d.astype(compute_dtype)
    w1_c = w1.astype(compute_dtype)
    w3_c = w3.astype(compute_dtype)
    w2_c = w2.astype(compute_dtype)

    vmem_cap = _vmem_capacity_bytes()
    tm, tf, need = _select_tiles(
        rows, d_model, d_ff,
        compute_itemsize=jnp.dtype(compute_dtype).itemsize,
        out_itemsize=jnp.dtype(out_dtype).itemsize,
        vmem_cap=vmem_cap,
    )
    assert d_ff % tf == 0, "d_ff chunk must divide d_ff exactly (reduction axis)"

    grid = (pl.cdiv(rows, tm), d_ff // tf)
    vmem_limit = int(min(0.9 * vmem_cap, max(2 * need, 64 << 20)))

    out = pl.pallas_call(
        _swiglu_kernel,
        out_shape=jax.ShapeDtypeStruct((rows, d_model), out_dtype),
        grid_spec=pltpu.PrefetchScalarGridSpec(
            num_scalar_prefetch=0,
            grid=grid,
            in_specs=[
                pl.BlockSpec((tm, d_model), lambda i, j: (i, 0)),   # x rows
                pl.BlockSpec((tf, d_model), lambda i, j: (j, 0)),   # W1 chunk  [d_ff, d_model]
                pl.BlockSpec((tf, d_model), lambda i, j: (j, 0)),   # W3 chunk  [d_ff, d_model]
                pl.BlockSpec((d_model, tf), lambda i, j: (0, j)),   # W2 chunk  [d_model, d_ff]
            ],
            out_specs=pl.BlockSpec((tm, d_model), lambda i, j: (i, 0)),
            scratch_shapes=[pltpu.VMEM((tm, d_model), jnp.float32)],
        ),
        compiler_params=pltpu.CompilerParams(
            dimension_semantics=("parallel", "arbitrary"),
            vmem_limit_bytes=vmem_limit,
        ),
    )(x_c, w1_c, w3_c, w2_c)

    return out.reshape(orig_shape)


# --------------------------------------------------------------------------- #
# Self-test                                                                   #
# --------------------------------------------------------------------------- #
if __name__ == "__main__":
    key = jax.random.PRNGKey(0)
    k_x, k1, k2, k3 = jax.random.split(key, 4)

    batch, seq, d_model = 2, 8, 64
    d_ff = math.ceil(d_model / 64.0) * 64          # PyTorch module default

    x = jax.random.normal(k_x, (batch, seq, d_model), dtype=jnp.float32)
    # torch.nn.Parameter(torch.randn(...)) -> standard-normal weights.
    w1 = jax.random.normal(k1, (d_ff, d_model), dtype=jnp.float32)
    w2 = jax.random.normal(k2, (d_model, d_ff), dtype=jnp.float32)
    w3 = jax.random.normal(k3, (d_ff, d_model), dtype=jnp.float32)

    y = swiglu(x, w1, w2, w3)
    y = jax.block_until_ready(y)

    # Pure-JAX reference (mirrors the PyTorch forward, f32).
    p1 = x @ w1.T
    p1 = p1 * jax.nn.sigmoid(p1)
    p3 = x @ w3.T
    ref = (p1 * p3) @ w2.T

    rel_err = jnp.max(jnp.abs(y - ref)) / (jnp.max(jnp.abs(ref)) + 1e-6)
    assert rel_err < 2e-2, f"mismatch vs reference: rel_err={rel_err}"

    print("KERNEL_OK")
</pallas_src>

<mosaic_0001>
module attributes {stable_mosaic.version = 11 : i64} {
  func.func @_swiglu_kernel(%arg0: i32, %arg1: i32, %arg2: memref<16x64xbf16, #tpu.memory_space<vmem>>, %arg3: memref<64x64xbf16, #tpu.memory_space<vmem>>, %arg4: memref<64x64xbf16, #tpu.memory_space<vmem>>, %arg5: memref<64x64xbf16, #tpu.memory_space<vmem>>, %arg6: memref<16x64xf32, #tpu.memory_space<vmem>>, %arg7: memref<16x64xf32, #tpu.memory_space<vmem>>) attributes {dimension_semantics = [#tpu.dimension_semantics<parallel>, #tpu.dimension_semantics<arbitrary>], iteration_bounds = array<i64: 1, 1>, scalar_prefetch = 0 : i64, scratch_operands = 1 : i64, tpu.core_type = #tpu.core_type<tc>, window_params = [{transform_indices = @transform_0, window_bounds = array<i64: 16, 64>}, {transform_indices = @transform_1, window_bounds = array<i64: 64, 64>}, {transform_indices = @transform_2, window_bounds = array<i64: 64, 64>}, {transform_indices = @transform_3, window_bounds = array<i64: 64, 64>}, {transform_indices = @transform_4, window_bounds = array<i64: 16, 64>}]} {
    %c0_i32 = arith.constant 0 : i32
    %0 = arith.cmpi eq, %arg1, %c0_i32 : i32
    %1 = arith.extui %0 : i1 to i32
    %c0_i32_0 = arith.constant 0 : i32
    %2 = arith.cmpi ne, %1, %c0_i32_0 : i32
    scf.if %2 {
      %cst_17 = arith.constant 0.000000e+00 : f32
      %24 = vector.broadcast %cst_17 : f32 to vector<16x64xf32>
      %c0_18 = arith.constant 0 : index
      %c0_19 = arith.constant 0 : index
      %25 = vector.load %arg7[%c0_18, %c0_19] : memref<16x64xf32, #tpu.memory_space<vmem>>, vector<16x64xf32>
      tpu.vector_store %arg7[%c0_18, %c0_19], %24 {strides = array<i32>} : memref<16x64xf32, #tpu.memory_space<vmem>>, vector<16x64xf32>,
    } else {
    }
    %c0 = arith.constant 0 : index
    %c0_1 = arith.constant 0 : index
    %3 = vector.load %arg2[%c0, %c0_1] : memref<16x64xbf16, #tpu.memory_space<vmem>>, vector<16x64xbf16>
    %c0_2 = arith.constant 0 : index
    %c0_3 = arith.constant 0 : index
    %4 = vector.load %arg3[%c0_2, %c0_3] : memref<64x64xbf16, #tpu.memory_space<vmem>>, vector<64x64xbf16>
    %cst = arith.constant dense<0.000000e+00> : vector<16x64xf32>
    %5 = tpu.matmul %3, %4, %cst {dimension_numbers = #tpu.dot_dimension_numbers<[1], [1], [0], [0], [0, 0, 1, 0], [], []>} : vector<16x64xbf16>, vector<64x64xbf16>, vector<16x64xf32> -> vector<16x64xf32>
    %c0_4 = arith.constant 0 : index
    %c0_5 = arith.constant 0 : index
    %6 = vector.load %arg4[%c0_4, %c0_5] : memref<64x64xbf16, #tpu.memory_space<vmem>>, vector<64x64xbf16>
    %cst_6 = arith.constant dense<0.000000e+00> : vector<16x64xf32>
    %7 = tpu.matmul %3, %6, %cst_6 {dimension_numbers = #tpu.dot_dimension_numbers<[1], [1], [0], [0], [0, 0, 1, 0], [], []>} : vector<16x64xbf16>, vector<64x64xbf16>, vector<16x64xf32> -> vector<16x64xf32>
    %8 = arith.negf %5 : vector<16x64xf32>
    %9 = math.exp %8 : vector<16x64xf32>
    %cst_7 = arith.constant 1.000000e+00 : f32
    %10 = vector.broadcast %cst_7 : f32 to vector<16x64xf32>
    %11 = arith.addf %10, %9 : vector<16x64xf32>
    %12 = arith.divf %10, %11 : vector<16x64xf32>
    %13 = arith.mulf %5, %12 : vector<16x64xf32>
    %14 = arith.mulf %13, %7 : vector<16x64xf32>
    %c0_8 = arith.constant 0 : index
    %c0_9 = arith.constant 0 : index
    %15 = vector.load %arg7[%c0_8, %c0_9] : memref<16x64xf32, #tpu.memory_space<vmem>>, vector<16x64xf32>
    %16 = arith.truncf %14 : vector<16x64xf32> to vector<16x64xbf16>
    %c0_10 = arith.constant 0 : index
    %c0_11 = arith.constant 0 : index
    %17 = vector.load %arg5[%c0_10, %c0_11] : memref<64x64xbf16, #tpu.memory_space<vmem>>, vector<64x64xbf16>
    %cst_12 = arith.constant dense<0.000000e+00> : vector<16x64xf32>
    %18 = tpu.matmul %16, %17, %cst_12 {dimension_numbers = #tpu.dot_dimension_numbers<[1], [1], [0], [0], [0, 0, 1, 0], [], []>} : vector<16x64xbf16>, vector<64x64xbf16>, vector<16x64xf32> -> vector<16x64xf32>
    %19 = arith.addf %15, %18 : vector<16x64xf32>
    %c0_13 = arith.constant 0 : index
    %c0_14 = arith.constant 0 : index
    %20 = vector.load %arg7[%c0_13, %c0_14] : memref<16x64xf32, #tpu.memory_space<vmem>>, vector<16x64xf32>
    tpu.vector_store %arg7[%c0_13, %c0_14], %19 {strides = array<i32>} : memref<16x64xf32, #tpu.memory_space<vmem>>, vector<16x64xf32>,
    %c0_i32_15 = arith.constant 0 : i32
    %21 = arith.cmpi eq, %arg1, %c0_i32_15 : i32
    %22 = arith.extui %21 : i1 to i32
    %c0_i32_16 = arith.constant 0 : i32
    %23 = arith.cmpi ne, %22, %c0_i32_16 : i32
    scf.if %23 {
      %c0_17 = arith.constant 0 : index
      %c0_18 = arith.constant 0 : index
      %24 = vector.load %arg7[%c0_17, %c0_18] : memref<16x64xf32, #tpu.memory_space<vmem>>, vector<16x64xf32>
      %c0_19 = arith.constant 0 : index
      %c0_20 = arith.constant 0 : index
      %25 = vector.load %arg6[%c0_19, %c0_20] : memref<16x64xf32, #tpu.memory_space<vmem>>, vector<16x64xf32>
      tpu.vector_store %arg6[%c0_19, %c0_20], %24 {strides = array<i32>} : memref<16x64xf32, #tpu.memory_space<vmem>>, vector<16x64xf32>,
    } else {
    }
    return
  }
  func.func @transform_0(%arg0: i32, %arg1: i32) -> (i32, i32) {
    %c0_i32 = arith.constant 0 : i32
    %c0_i32_0 = arith.constant 0 : i32
    return %arg0, %c0_i32 : i32, i32
  }
  func.func @transform_1(%arg0: i32, %arg1: i32) -> (i32, i32) {
    %c0_i32 = arith.constant 0 : i32
    %c0_i32_0 = arith.constant 0 : i32
    return %arg1, %c0_i32 : i32, i32
  }
  func.func @transform_2(%arg0: i32, %arg1: i32) -> (i32, i32) {
    %c0_i32 = arith.constant 0 : i32
    %c0_i32_0 = arith.constant 0 : i32
    return %arg1, %c0_i32 : i32, i32
  }
  func.func @transform_3(%arg0: i32, %arg1: i32) -> (i32, i32) {
    %c0_i32 = arith.constant 0 : i32
    %c0_i32_0 = arith.constant 0 : i32
    return %c0_i32, %arg1 : i32, i32
  }
  func.func @transform_4(%arg0: i32, %arg1: i32) -> (i32, i32) {
    %c0_i32 = arith.constant 0 : i32
    %c0_i32_0 = arith.constant 0 : i32
    return %arg0, %c0_i32 : i32, i32
  }
}

</mosaic_0001>

<llo_original>
// kernel: tpu_custom_call.1
$region0: #{tpu_custom_call.1}
  #allocation0 [shape = 'u32[]', space=smem, size = 0x4, offset = 0x4, fixed_abs, tag = 'smem constant byte address 0x4 - core index']
  #allocation1 [shape = 'u32[144,128]{1,0:T(1,128)}', space=vmem, size = 0x12000, scoped, tag = 'internal scratch']
  #allocation2 [shape = 'f32[16,64]{1,0:T(8,128)}', space=vmem, size = 0x2000, scoped, tag = 'scratch operand']
  %s0 = inlined_call_operand.hbm [shape: bf16[16,64], index: 0, kind: input, shape index: {}]
  %s1 = inlined_call_operand.hbm [shape: bf16[64,64], index: 1, kind: input, shape index: {}]
  %s2 = inlined_call_operand.hbm [shape: bf16[64,64], index: 2, kind: input, shape index: {}]
  %s3 = inlined_call_operand.hbm [shape: bf16[64,64], index: 3, kind: input, shape index: {}]
  %s4 = inlined_call_operand.hbm [shape: f32[16,64], index: 4, kind: output, shape index: {}]
  %s5 = sld [smem:[#allocation0]]
  $region50: #{tpu_custom_call.1} parent=0
    _
  %s7 = ssub.s32 1, %s5
  %s8 = scalar_select 0, %s7, %s5
  $region1: #{tpu_custom_call.1} parent=0
    #allocation3 [shape = 'u8[4096]{0}', space=vmem, size = 0x1000, scoped, tag = 'input window, operand 0, single buffered']
    #allocation4 [shape = 's32[1]{0}', space=sflag, size = 0x4, scoped, tag = 'scoped memory for tpu_custom_call.1']
    #allocation5 [shape = 's32[1]{0}', space=sflag, size = 0x4, scoped, tag = 'scoped memory for tpu_custom_call.1']
    #allocation6 [shape = 'u8[16384]{0}', space=vmem, size = 0x4000, scoped, tag = 'input window, operand 1, single buffered']
    #allocation7 [shape = 's32[1]{0}', space=sflag, size = 0x4, scoped, tag = 'scoped memory for tpu_custom_call.1']
    #allocation8 [shape = 'u8[16384]{0}', space=vmem, size = 0x4000, scoped, tag = 'input window, operand 2, single buffered']
    #allocation9 [shape = 'u8[16384]{0}', space=vmem, size = 0x4000, scoped, tag = 'input window, operand 3, single buffered']
    #allocation10 [shape = 's32[1]{0}', space=sflag, size = 0x4, scoped, tag = 'scoped memory for tpu_custom_call.1']
    #allocation11 [shape = 'u8[8192]{0}', space=vmem, size = 0x2000, scoped, tag = 'output window, operand 0, single buffered']
    %9 = vsyncpa [#allocation4], 0
    %10 = vsyncpa [#allocation7], 0
    %11 = vsyncpa [#allocation10], 0
    %12 = vsyncpa [#allocation5], 0
    // Predicated region
    $region2: #{tpu_custom_call.1} parent=1 // pred_check
      _
    $region3: #{tpu_custom_call.1} parent=1 // pred_check_branch
      %14 = sbr.rel (0) target = $region5
    $region4: #{tpu_custom_call.1} parent=1 // pred_region
      %s16 = ssub.s32 128, 128
      %17 = vsyncadd [#allocation4], %s16
      %s18 = sshll.u32 [#allocation3], 4
      %s19 = int_to_ptr.vmem [resolvable:$true] %s18
      %24 = dma.hbm_to_vmem [thread:$0]  %s0, 128, %s19, [#allocation4], 64, 64, 4
    $region5: #{tpu_custom_call.1} parent=1 // pred_fallthru
      _
    // Predicated region
    $region6: #{tpu_custom_call.1} parent=1 // pred_check
      _
    $region7: #{tpu_custom_call.1} parent=1 // pred_check_branch
      %26 = sbr.rel (0) target = $region9
    $region8: #{tpu_custom_call.1} parent=1 // pred_region
      %s28 = ssub.s32 512, 512
      %29 = vsyncadd [#allocation7], %s28
      %s30 = sshll.u32 [#allocation6], 4
      %s31 = int_to_ptr.vmem [resolvable:$true] %s30
      %36 = dma.hbm_to_vmem [thread:$0]  %s1, 512, %s31, [#allocation7], 64, 64, 4
    $region9: #{tpu_custom_call.1} parent=1 // pred_fallthru
      _
    // Predicated region
    $region10: #{tpu_custom_call.1} parent=1 // pred_check
      _
    $region11: #{tpu_custom_call.1} parent=1 // pred_check_branch
      %38 = sbr.rel (0) target = $region13
    $region12: #{tpu_custom_call.1} parent=1 // pred_region
      %s40 = ssub.s32 512, 512
      %41 = vsyncadd [#allocation7], %s40
      %s42 = sshll.u32 [#allocation8], 4
      %s43 = int_to_ptr.vmem [resolvable:$true] %s42
      %48 = dma.hbm_to_vmem [thread:$0]  %s2, 512, %s43, [#allocation7], 64, 64, 4
    $region13: #{tpu_custom_call.1} parent=1 // pred_fallthru
      _
    // Predicated region
    $region14: #{tpu_custom_call.1} parent=1 // pred_check
      _
    $region15: #{tpu_custom_call.1} parent=1 // pred_check_branch
      %50 = sbr.rel (0) target = $region17
    $region16: #{tpu_custom_call.1} parent=1 // pred_region
      %s52 = ssub.s32 512, 512
      %53 = vsyncadd [#allocation10], %s52
      %s54 = sshll.u32 [#allocation9], 4
      %s55 = int_to_ptr.vmem [resolvable:$true] %s54
      %60 = dma.hbm_to_vmem [thread:$0]  %s3, 512, %s55, [#allocation10], 64, 64, 4
    $region17: #{tpu_custom_call.1} parent=1 // pred_fallthru
      _
    // Predicated region
    $region18: #{tpu_custom_call.1} parent=1 // pred_check
      _
    $region19: #{tpu_custom_call.1} parent=1 // pred_check_branch
      %62 = sbr.rel (0) target = $region21
    $region20: #{tpu_custom_call.1} parent=1 // pred_region
      %63 = dma.done [#allocation4], 128
    $region21: #{tpu_custom_call.1} parent=1 // pred_fallthru
      _
    // Predicated region
    $region22: #{tpu_custom_call.1} parent=1 // pred_check
      _
    $region23: #{tpu_custom_call.1} parent=1 // pred_check_branch
      %65 = sbr.rel (0) target = $region25
    $region24: #{tpu_custom_call.1} parent=1 // pred_region
      %66 = dma.done [#allocation7], 512
    $region25: #{tpu_custom_call.1} parent=1 // pred_fallthru
      _
    // Predicated region
    $region26: #{tpu_custom_call.1} parent=1 // pred_check
      _
    $region27: #{tpu_custom_call.1} parent=1 // pred_check_branch
      %68 = sbr.rel (0) target = $region29
    $region28: #{tpu_custom_call.1} parent=1 // pred_region
      %69 = dma.done [#allocation7], 512
    $region29: #{tpu_custom_call.1} parent=1 // pred_fallthru
      _
    // Predicated region
    $region30: #{tpu_custom_call.1} parent=1 // pred_check
      _
    $region31: #{tpu_custom_call.1} parent=1 // pred_check_branch
      %71 = sbr.rel (0) target = $region33
    $region32: #{tpu_custom_call.1} parent=1 // pred_region
      %72 = dma.done [#allocation10], 512
    $region33: #{tpu_custom_call.1} parent=1 // pred_fallthru
      _
    %p74 = scmp.eq.s32.totalorder 0, 0
    // Predicated region
    $region34: #{tpu_custom_call.1} parent=1 // pred_check
      %p75 = pneg %p74
    $region35: #{tpu_custom_call.1} parent=1 // pred_check_branch
      %77 = sbr.rel (%p75) target = $region37
    $region36: #{tpu_custom_call.1} parent=1 // pred_region
      %vm78 = vcmask 523264
      %79 = vst.msk [vmem:[#allocation2] sm:$0xff] %vm78, 0.0
      %80 = vst.msk [vmem:[#allocation2 + $0x8] sm:$0xff] %vm78, 0.0
    $region37: #{tpu_custom_call.1} parent=1 // pred_fallthru
      _
    %v81 = vld [vmem:[#allocation3] sm:$0xf]
    %v82 = vld [vmem:[#allocation3 + $0x4] sm:$0xf]
    %v83 = vld [vmem:[#allocation6] sm:$0xf]
    %v84 = vld [vmem:[#allocation6 + $0x4] sm:$0xf]
    %v85 = vld [vmem:[#allocation6 + $0x8] sm:$0xf]
    %v86 = vld [vmem:[#allocation6 + $0xc] sm:$0xf]
    %v87 = vld [vmem:[#allocation6 + $0x10] sm:$0xf]
    %v88 = vld [vmem:[#allocation6 + $0x14] sm:$0xf]
    %v89 = vld [vmem:[#allocation6 + $0x18] sm:$0xf]
    %v90 = vld [vmem:[#allocation6 + $0x1c] sm:$0xf]
    %v93 = vunpack.c.l.b16 %v81
    %v94 = vunpack.c.l.b16 %v82
    %v95 = vpack.c.b16 %v94, %v93
    %v104 = vunpack.c.l.b16 %v83
    %v105 = vunpack.c.l.b16 %v84
    %v106 = vunpack.c.l.b16 %v85
    %v107 = vunpack.c.l.b16 %v86
    %v108 = vunpack.c.l.b16 %v87
    %v109 = vunpack.c.l.b16 %v88
    %v110 = vunpack.c.l.b16 %v89
    %v111 = vunpack.c.l.b16 %v90
    %v112 = vpack.c.b16 %v105, %v104
    %v113 = vpack.c.b16 %v107, %v106
    %v114 = vpack.c.b16 %v109, %v108
    %v115 = vpack.c.b16 %v111, %v110
    %vm116 = vcmask 523264
    %v118 = vsel %vm116, %v95, 0
    %v121 = vsel %vm116, %v112, 0
    %v124 = vsel %vm116, %v113, 0
    %v127 = vsel %vm116, %v114, 0
    %v130 = vsel %vm116, %v115, 0
    %132 = vmatprep.subr.bf16.mxu0 0
    %133 = vmatpush1.bf16.xpose.msra.mxu0 %v121
    %134 = vmatprep.subr.bf16.mxu0 0
    %135 = vmatpush1.bf16.xpose.msra.mxu0 %v124
    %136 = vmatprep.subr.bf16.mxu0 0
    %137 = vmatpush1.bf16.xpose.msra.mxu0 %v127
    %138 = vmatprep.subr.bf16.mxu0 0
    %139 = vmatpush1.bf16.xpose.msra.mxu0 %v130
    %140 = vmatprep.subr.bf16.mxu0 0
    %141 = vmatpush1.bf16.xpose.msra.mxu0 0
    %142 = vmatprep.subr.bf16.mxu0 0
    %143 = vmatpush1.bf16.xpose.msra.mxu0 0
    %144 = vmatprep.subr.bf16.mxu0 0
    %145 = vmatpush1.bf16.xpose.msra.mxu0 0
    %146 = vmatprep.subr.bf16.mxu0 0
    %147 = vmatpush1.bf16.xpose.msra.mxu0 0
    %148 = vmatprep.subr.bf16.mxu0 0
    %149 = vmatpush1.bf16.xpose.msra.mxu0 0
    %150 = vmatprep.subr.bf16.mxu0 0
    %151 = vmatpush1.bf16.xpose.msra.mxu0 0
    %152 = vmatprep.subr.bf16.mxu0 0
    %153 = vmatpush1.bf16.xpose.msra.mxu0 0
    %154 = vmatprep.subr.bf16.mxu0 0
    %155 = vmatpush1.bf16.xpose.msra.mxu0 0
    %156 = vmatprep.subr.bf16.mxu0 0
    %157 = vmatpush1.bf16.xpose.msra.mxu0 0
    %158 = vmatprep.subr.bf16.mxu0 0
    %159 = vmatpush1.bf16.xpose.msra.mxu0 0
    %160 = vmatprep.subr.bf16.mxu0 0
    %161 = vmatpush1.bf16.xpose.msra.mxu0 0
    %162 = vmatprep.subr.bf16.mxu0 0
    %163 = vmatpush1.bf16.xpose.msra.mxu0 0
    %164 = vmatprep.mubr.bf16.mxu0 0
    %165 = vmatmul.mubr.bf16.gmra.mrb[0].mxu0 %v118
    %v166 = vpop.f32.mrb[0].mxu0
    %v167 = vadd.f32 0.0, %v166
    %v168 = vpop.f32.mrb[0].mxu0
    %v169 = vpop.f32.mrb[0].mxu0
    %v170 = vadd.f32 0.0, %v169
    %v171 = vpop.f32.mrb[0].mxu0
    %172 = vdwg.mxu0
    %v173 = vld [vmem:[#allocation8] sm:$0xf]
    %v174 = vld [vmem:[#allocation8 + $0x4] sm:$0xf]
    %v175 = vld [vmem:[#allocation8 + $0x8] sm:$0xf]
    %v176 = vld [vmem:[#allocation8 + $0xc] sm:$0xf]
    %v177 = vld [vmem:[#allocation8 + $0x10] sm:$0xf]
    %v178 = vld [vmem:[#allocation8 + $0x14] sm:$0xf]
    %v179 = vld [vmem:[#allocation8 + $0x18] sm:$0xf]
    %v180 = vld [vmem:[#allocation8 + $0x1c] sm:$0xf]
    %v189 = vunpack.c.l.b16 %v173
    %v190 = vunpack.c.l.b16 %v174
    %v191 = vunpack.c.l.b16 %v175
    %v192 = vunpack.c.l.b16 %v176
    %v193 = vunpack.c.l.b16 %v177
    %v194 = vunpack.c.l.b16 %v178
    %v195 = vunpack.c.l.b16 %v179
    %v196 = vunpack.c.l.b16 %v180
    %v197 = vpack.c.b16 %v190, %v189
    %v198 = vpack.c.b16 %v192, %v191
    %v199 = vpack.c.b16 %v194, %v193
    %v200 = vpack.c.b16 %v196, %v195
    %v202 = vsel %vm116, %v197, 0
    %v205 = vsel %vm116, %v198, 0
    %v208 = vsel %vm116, %v199, 0
    %v211 = vsel %vm116, %v200, 0
    %213 = vmatprep.subr.bf16.mxu0 0
    %214 = vmatpush1.bf16.xpose.msra.mxu0 %v202
    %215 = vmatprep.subr.bf16.mxu0 0
    %216 = vmatpush1.bf16.xpose.msra.mxu0 %v205
    %217 = vmatprep.subr.bf16.mxu0 0
    %218 = vmatpush1.bf16.xpose.msra.mxu0 %v208
    %219 = vmatprep.subr.bf16.mxu0 0
    %220 = vmatpush1.bf16.xpose.msra.mxu0 %v211
    %221 = vmatprep.subr.bf16.mxu0 0
    %222 = vmatpush1.bf16.xpose.msra.mxu0 0
    %223 = vmatprep.subr.bf16.mxu0 0
    %224 = vmatpush1.bf16.xpose.msra.mxu0 0
    %225 = vmatprep.subr.bf16.mxu0 0
    %226 = vmatpush1.bf16.xpose.msra.mxu0 0
    %227 = vmatprep.subr.bf16.mxu0 0
    %228 = vmatpush1.bf16.xpose.msra.mxu0 0
    %229 = vmatprep.subr.bf16.mxu0 0
    %230 = vmatpush1.bf16.xpose.msra.mxu0 0
    %231 = vmatprep.subr.bf16.mxu0 0
    %232 = vmatpush1.bf16.xpose.msra.mxu0 0
    %233 = vmatprep.subr.bf16.mxu0 0
    %234 = vmatpush1.bf16.xpose.msra.mxu0 0
    %235 = vmatprep.subr.bf16.mxu0 0
    %236 = vmatpush1.bf16.xpose.msra.mxu0 0
    %237 = vmatprep.subr.bf16.mxu0 0
    %238 = vmatpush1.bf16.xpose.msra.mxu0 0
    %239 = vmatprep.subr.bf16.mxu0 0
    %240 = vmatpush1.bf16.xpose.msra.mxu0 0
    %241 = vmatprep.subr.bf16.mxu0 0
    %242 = vmatpush1.bf16.xpose.msra.mxu0 0
    %243 = vmatprep.subr.bf16.mxu0 0
    %244 = vmatpush1.bf16.xpose.msra.mxu0 0
    %245 = vmatprep.mubr.bf16.mxu0 0
    %246 = vmatmul.mubr.bf16.gmra.mrb[0].mxu0 %v118
    %v247 = vpop.f32.mrb[0].mxu0
    %v248 = vadd.f32 0.0, %v247
    %v249 = vpop.f32.mrb[0].mxu0
    %v250 = vpop.f32.mrb[0].mxu0
    %v251 = vadd.f32 0.0, %v250
    %v252 = vpop.f32.mrb[0].mxu0
    %253 = vdwg.mxu0
    %v254 = vxor.u32 %v167, 2147483648
    %v255 = vxor.u32 %v170, 2147483648
    %v256 = vmul.f32 %v254, 1.442695
    %v257 = vpow.pop %v256
    %v258 = vmul.f32 %v255, 1.442695
    %v259 = vpow.pop %v258
    %v260 = vadd.f32 %v257, 1.0
    %v261 = vadd.f32 %v259, 1.0
    %v262 = vrcp.pop %v260
    %v263 = vmul.f32 1.0, %v262
    %v264 = vrcp.pop %v261
    %v265 = vmul.f32 1.0, %v264
    %v266 = vmul.f32 %v167, %v263
    %v267 = vmul.f32 %v170, %v265
    %v268 = vmul.f32 %v266, %v248
    %v269 = vmul.f32 %v267, %v251
    %v270 = vld [vmem:[#allocation2] sm:$0xff]
    %v271 = vld [vmem:[#allocation2 + $0x8] sm:$0xff]
    %v272 = vpack.c.bf16 %v269, %v268
    %v273 = vld [vmem:[#allocation9] sm:$0xf]
    %v274 = vld [vmem:[#allocation9 + $0x4] sm:$0xf]
    %v275 = vld [vmem:[#allocation9 + $0x8] sm:$0xf]
    %v276 = vld [vmem:[#allocation9 + $0xc] sm:$0xf]
    %v277 = vld [vmem:[#allocation9 + $0x10] sm:$0xf]
    %v278 = vld [vmem:[#allocation9 + $0x14] sm:$0xf]
    %v279 = vld [vmem:[#allocation9 + $0x18] sm:$0xf]
    %v280 = vld [vmem:[#allocation9 + $0x1c] sm:$0xf]
    %v289 = vunpack.c.l.b16 %v273
    %v290 = vunpack.c.l.b16 %v274
    %v291 = vunpack.c.l.b16 %v275
    %v292 = vunpack.c.l.b16 %v276
    %v293 = vunpack.c.l.b16 %v277
    %v294 = vunpack.c.l.b16 %v278
    %v295 = vunpack.c.l.b16 %v279
    %v296 = vunpack.c.l.b16 %v280
    %v297 = vpack.c.b16 %v290, %v289
    %v298 = vpack.c.b16 %v292, %v291
    %v299 = vpack.c.b16 %v294, %v293
    %v300 = vpack.c.b16 %v296, %v295
    %v302 = vsel %vm116, %v272, 0
    %v305 = vsel %vm116, %v297, 0
    %v308 = vsel %vm116, %v298, 0
    %v311 = vsel %vm116, %v299, 0
    %v314 = vsel %vm116, %v300, 0
    %316 = vmatprep.subr.bf16.mxu0 0
    %317 = vmatpush1.bf16.xpose.msra.mxu0 %v305
    %318 = vmatprep.subr.bf16.mxu0 0
    %319 = vmatpush1.bf16.xpose.msra.mxu0 %v308
    %320 = vmatprep.subr.bf16.mxu0 0
    %321 = vmatpush1.bf16.xpose.msra.mxu0 %v311
    %322 = vmatprep.subr.bf16.mxu0 0
    %323 = vmatpush1.bf16.xpose.msra.mxu0 %v314
    %324 = vmatprep.subr.bf16.mxu0 0
    %325 = vmatpush1.bf16.xpose.msra.mxu0 0
    %326 = vmatprep.subr.bf16.mxu0 0
    %327 = vmatpush1.bf16.xpose.msra.mxu0 0
    %328 = vmatprep.subr.bf16.mxu0 0
    %329 = vmatpush1.bf16.xpose.msra.mxu0 0
    %330 = vmatprep.subr.bf16.mxu0 0
    %331 = vmatpush1.bf16.xpose.msra.mxu0 0
    %332 = vmatprep.subr.bf16.mxu0 0
    %333 = vmatpush1.bf16.xpose.msra.mxu0 0
    %334 = vmatprep.subr.bf16.mxu0 0
    %335 = vmatpush1.bf16.xpose.msra.mxu0 0
    %336 = vmatprep.subr.bf16.mxu0 0
    %337 = vmatpush1.bf16.xpose.msra.mxu0 0
    %338 = vmatprep.subr.bf16.mxu0 0
    %339 = vmatpush1.bf16.xpose.msra.mxu0 0
    %340 = vmatprep.subr.bf16.mxu0 0
    %341 = vmatpush1.bf16.xpose.msra.mxu0 0
    %342 = vmatprep.subr.bf16.mxu0 0
    %343 = vmatpush1.bf16.xpose.msra.mxu0 0
    %344 = vmatprep.subr.bf16.mxu0 0
    %345 = vmatpush1.bf16.xpose.msra.mxu0 0
    %346 = vmatprep.subr.bf16.mxu0 0
    %347 = vmatpush1.bf16.xpose.msra.mxu0 0
    %348 = vmatprep.mubr.bf16.mxu0 0
    %349 = vmatmul.mubr.bf16.gmra.mrb[0].mxu0 %v302
    %v350 = vpop.f32.mrb[0].mxu0
    %v351 = vadd.f32 0.0, %v350
    %v352 = vpop.f32.mrb[0].mxu0
    %v353 = vpop.f32.mrb[0].mxu0
    %v354 = vadd.f32 0.0, %v353
    %v355 = vpop.f32.mrb[0].mxu0
    %356 = vdwg.mxu0
    %v357 = vadd.f32 %v270, %v351
    %v358 = vadd.f32 %v271, %v354
    %359 = vst.msk [vmem:[#allocation2] sm:$0xff] %vm116, %v357
    %360 = vst.msk [vmem:[#allocation2 + $0x8] sm:$0xff] %vm116, %v358
    // Predicated region
    $region38: #{tpu_custom_call.1} parent=1 // pred_check
      %p361 = pneg %p74
    $region39: #{tpu_custom_call.1} parent=1 // pred_check_branch
      %363 = sbr.rel (%p361) target = $region41
    $region40: #{tpu_custom_call.1} parent=1 // pred_region
      %v364 = vld [vmem:[#allocation2] sm:$0xff]
      %v365 = vld [vmem:[#allocation2 + $0x8] sm:$0xff]
      %366 = vst.msk [vmem:[#allocation11] sm:$0xff] %vm116, %v364
      %367 = vst.msk [vmem:[#allocation11 + $0x8] sm:$0xff] %vm116, %v365
    $region41: #{tpu_custom_call.1} parent=1 // pred_fallthru
      _
    // Predicated region
    $region42: #{tpu_custom_call.1} parent=1 // pred_check
      _
    $region43: #{tpu_custom_call.1} parent=1 // pred_check_branch
      %369 = sbr.rel (0) target = $region45
    $region44: #{tpu_custom_call.1} parent=1 // pred_region
      %s371 = ssub.s32 256, 256
      %372 = vsyncadd [#allocation5], %s371
      %s373 = sshll.u32 [#allocation11], 4
      %s374 = int_to_ptr.vmem [resolvable:$true] %s373
      %379 = dma.vmem_to_hbm [thread:$0]  %s374, 256, %s4, [#allocation5], 128, 128, 8
    $region45: #{tpu_custom_call.1} parent=1 // pred_fallthru
      _
    // Predicated region
    $region46: #{tpu_custom_call.1} parent=1 // pred_check
      _
    $region47: #{tpu_custom_call.1} parent=1 // pred_check_branch
      %381 = sbr.rel (0) target = $region49
    $region48: #{tpu_custom_call.1} parent=1 // pred_region
      %382 = dma.done [#allocation5], 256
    $region49: #{tpu_custom_call.1} parent=1 // pred_fallthru
      _
    %383 = vsyncpa [#allocation4], 1
    %384 = vsyncpa [#allocation7], 1
    %385 = vsyncpa [#allocation10], 1
    %386 = vsyncpa [#allocation5], 1

</llo_original>
